<compile_context>
chip_gen: v5e
topology: v5e:2x2
jax: 0.10.0
libtpu: 0.0.40
codegen_flags: <defaults>
</compile_context>

<pallas_src>
import jax
import jax.numpy as jnp
from jax.experimental import pallas as pl
from jax.experimental.pallas import tpu as pltpu

EPS = 1e-5     # PyTorch nn.LayerNorm default
LANE = 128     # lane width / padded class dimension


def _round_up(n, m):
    return ((n + m - 1) // m) * m


def _classifier_kernel(x_ref, g1_ref, be1_ref, w1_ref, b1_ref,
                       g2_ref, be2_ref, w2_ref, b2_ref, out_ref):
    # --- LayerNorm 1 over feature dim (f32 math) ---
    x = x_ref[...].astype(jnp.float32)
    mu = jnp.mean(x, axis=-1, keepdims=True)
    var = jnp.mean((x - mu) ** 2, axis=-1, keepdims=True)
    xn = (x - mu) * jax.lax.rsqrt(var + EPS)
    xn = xn * g1_ref[...] + be1_ref[...]

    # --- Linear 1 (D -> H): bf16 MXU inputs, f32 accumulation, then ReLU ---
    h = jnp.dot(xn.astype(jnp.bfloat16), w1_ref[...],
                preferred_element_type=jnp.float32) + b1_ref[...]
    h = jnp.maximum(h, 0.0)

    # --- LayerNorm 2 over hidden dim (f32 math) ---
    mu2 = jnp.mean(h, axis=-1, keepdims=True)
    var2 = jnp.mean((h - mu2) ** 2, axis=-1, keepdims=True)
    hn = (h - mu2) * jax.lax.rsqrt(var2 + EPS)
    hn = hn * g2_ref[...] + be2_ref[...]

    # --- Linear 2 (H -> C_pad=128), lane-dense store ---
    out = jnp.dot(hn.astype(jnp.bfloat16), w2_ref[...],
                  preferred_element_type=jnp.float32) + b2_ref[...]
    out_ref[...] = out.astype(out_ref.dtype)


def improved_global_classifier(x, params, num_classes, *, block_b=512):
    """x: (B, D) float array. params: dict from init_params (C padded to 128).

    Returns (B, num_classes) float32 logits."""
    B, D = x.shape
    Cp = params["w2"].shape[1]          # padded class width (128)

    # Batch tile: multiple of 8 sublanes, capped at block_b; pad B to a
    # multiple of the tile so every grid step sees a full block.
    TB = min(block_b, _round_up(B, 8))
    B_pad = _round_up(B, TB)

    # Halve the dominant HBM stream: ship x as bf16 (LN math is f32 in-kernel).
    x_bf = x.astype(jnp.bfloat16)
    if B_pad != B:
        x_bf = jnp.pad(x_bf, ((0, B_pad - B), (0, 0)))

    def resident(a):
        ndim = a.ndim
        return pl.BlockSpec(a.shape, lambda i: (0,) * ndim)

    args = (
        x_bf,
        params["ln1_g"], params["ln1_b"],
        params["w1"], params["b1"],
        params["ln2_g"], params["ln2_b"],
        params["w2"], params["b2"],
    )

    out = pl.pallas_call(
        _classifier_kernel,
        out_shape=jax.ShapeDtypeStruct((B_pad, Cp), jnp.float32),
        grid=(B_pad // TB,),
        in_specs=[pl.BlockSpec((TB, D), lambda i: (i, 0))]
                 + [resident(a) for a in args[1:]],
        out_specs=pl.BlockSpec((TB, Cp), lambda i: (i, 0)),
        compiler_params=pltpu.CompilerParams(
            dimension_semantics=("parallel",)),
    )(*args)

    return out[:B, :num_classes]


def init_params(key, feature_dim=128, hidden=256, num_classes=10):
    """Matches the PyTorch module's _initialize_weights:
    Linear weights ~ kaiming_normal_(mode='fan_out', nonlinearity='relu')
    => std = sqrt(2 / fan_out); biases = 0; LayerNorm weight=1, bias=0.
    Weights stored as (in, out); second linear is zero-padded to 128 output
    lanes; matmul weights stored in bf16."""
    k1, k2 = jax.random.split(key)
    std1 = (2.0 / hidden) ** 0.5          # fan_out of Linear(D, 256) = 256
    std2 = (2.0 / num_classes) ** 0.5     # fan_out of Linear(256, C) = C

    w1 = std1 * jax.random.normal(k1, (feature_dim, hidden), jnp.float32)
    w2 = std2 * jax.random.normal(k2, (hidden, num_classes), jnp.float32)
    w2_pad = jnp.zeros((hidden, LANE), jnp.float32).at[:, :num_classes].set(w2)

    return {
        "ln1_g": jnp.ones((1, feature_dim), jnp.float32),
        "ln1_b": jnp.zeros((1, feature_dim), jnp.float32),
        "w1": w1.astype(jnp.bfloat16),
        "b1": jnp.zeros((1, hidden), jnp.float32),
        "ln2_g": jnp.ones((1, hidden), jnp.float32),
        "ln2_b": jnp.zeros((1, hidden), jnp.float32),
        "w2": w2_pad.astype(jnp.bfloat16),
        "b2": jnp.zeros((1, LANE), jnp.float32),
    }


def _reference(x, p, num_classes):
    """Plain-JAX reference mirroring the PyTorch forward with the same
    declared precision (f32 LayerNorm, bf16 matmul inputs, f32 accumulation)."""
    def ln(v, g, b):
        mu = jnp.mean(v, axis=-1, keepdims=True)
        var = jnp.mean((v - mu) ** 2, axis=-1, keepdims=True)
        return (v - mu) / jnp.sqrt(var + EPS) * g + b

    x32 = x.astype(jnp.bfloat16).astype(jnp.float32)
    xn = ln(x32, p["ln1_g"], p["ln1_b"])
    h = jnp.dot(xn.astype(jnp.bfloat16), p["w1"],
                preferred_element_type=jnp.float32) + p["b1"]
    h = jnp.maximum(h, 0.0)
    hn = ln(h, p["ln2_g"], p["ln2_b"])
    out = jnp.dot(hn.astype(jnp.bfloat16), p["w2"],
                  preferred_element_type=jnp.float32) + p["b2"]
    return out[:, :num_classes]


if __name__ == "__main__":
    key = jax.random.PRNGKey(0)
    kx, kp = jax.random.split(key)

    # Small shapes consistent with the module defaults (feature_dim=128, C=10).
    # NOTE: at batches this tiny the call is launch-overhead bound; the kernel
    # pays off once B is in the thousands (then block_b defaults to 512).
    B, D, C = 20, 128, 10
    x = jax.random.normal(kx, (B, D), jnp.float32)
    params = init_params(kp, feature_dim=D, hidden=256, num_classes=C)

    # Use a small batch tile here so the test exercises a multi-step grid
    # (grid=(3,)) plus the row-padding path (20 -> 24 rows).
    out = improved_global_classifier(x, params, num_classes=C, block_b=8)
    out = jax.block_until_ready(out)

    ref = _reference(x, params, C)
    assert out.shape == (B, C)
    assert jnp.allclose(out, ref, atol=2e-3, rtol=2e-3), "mismatch vs reference"

    print("KERNEL_OK")
</pallas_src>

<mosaic_0001>
module attributes {stable_mosaic.version = 11 : i64} {
  func.func @_classifier_kernel(%arg0: i32, %arg1: memref<8x128xbf16, #tpu.memory_space<vmem>>, %arg2: memref<1x128xf32, #tpu.memory_space<vmem>>, %arg3: memref<1x128xf32, #tpu.memory_space<vmem>>, %arg4: memref<128x256xbf16, #tpu.memory_space<vmem>>, %arg5: memref<1x256xf32, #tpu.memory_space<vmem>>, %arg6: memref<1x256xf32, #tpu.memory_space<vmem>>, %arg7: memref<1x256xf32, #tpu.memory_space<vmem>>, %arg8: memref<256x128xbf16, #tpu.memory_space<vmem>>, %arg9: memref<1x128xf32, #tpu.memory_space<vmem>>, %arg10: memref<8x128xf32, #tpu.memory_space<vmem>>) attributes {dimension_semantics = [#tpu.dimension_semantics<parallel>], iteration_bounds = array<i64: 3>, scalar_prefetch = 0 : i64, scratch_operands = 0 : i64, tpu.core_type = #tpu.core_type<tc>, window_params = [{transform_indices = @transform_0, window_bounds = array<i64: 8, 128>}, {pipeline_mode = #tpu.pipeline_mode<synchronous>, transform_indices = @transform_1, window_bounds = array<i64: 1, 128>}, {pipeline_mode = #tpu.pipeline_mode<synchronous>, transform_indices = @transform_2, window_bounds = array<i64: 1, 128>}, {pipeline_mode = #tpu.pipeline_mode<synchronous>, transform_indices = @transform_3, window_bounds = array<i64: 128, 256>}, {pipeline_mode = #tpu.pipeline_mode<synchronous>, transform_indices = @transform_4, window_bounds = array<i64: 1, 256>}, {pipeline_mode = #tpu.pipeline_mode<synchronous>, transform_indices = @transform_5, window_bounds = array<i64: 1, 256>}, {pipeline_mode = #tpu.pipeline_mode<synchronous>, transform_indices = @transform_6, window_bounds = array<i64: 1, 256>}, {pipeline_mode = #tpu.pipeline_mode<synchronous>, transform_indices = @transform_7, window_bounds = array<i64: 256, 128>}, {pipeline_mode = #tpu.pipeline_mode<synchronous>, transform_indices = @transform_8, window_bounds = array<i64: 1, 128>}, {transform_indices = @transform_9, window_bounds = array<i64: 8, 128>}]} {
    %c0 = arith.constant 0 : index
    %c0_0 = arith.constant 0 : index
    %0 = vector.load %arg1[%c0, %c0_0] : memref<8x128xbf16, #tpu.memory_space<vmem>>, vector<8x128xbf16>
    %1 = arith.extf %0 : vector<8x128xbf16> to vector<8x128xf32>
    %cst = arith.constant dense<0.000000e+00> : vector<8xf32>
    %2 = vector.multi_reduction <add>, %1, %cst [1] : vector<8x128xf32> to vector<8xf32>
    %3 = vector.shape_cast %2 : vector<8xf32> to vector<8x1xf32>
    %cst_1 = arith.constant 1.280000e+02 : f32
    %4 = vector.broadcast %cst_1 : f32 to vector<8x1xf32>
    %5 = arith.divf %3, %4 : vector<8x1xf32>
    %6 = vector.broadcast %5 : vector<8x1xf32> to vector<8x128xf32>
    %7 = arith.subf %1, %6 : vector<8x128xf32>
    %8 = arith.mulf %7, %7 : vector<8x128xf32>
    %cst_2 = arith.constant dense<0.000000e+00> : vector<8xf32>
    %9 = vector.multi_reduction <add>, %8, %cst_2 [1] : vector<8x128xf32> to vector<8xf32>
    %10 = vector.shape_cast %9 : vector<8xf32> to vector<8x1xf32>
    %cst_3 = arith.constant 1.280000e+02 : f32
    %11 = vector.broadcast %cst_3 : f32 to vector<8x1xf32>
    %12 = arith.divf %10, %11 : vector<8x1xf32>
    %13 = vector.broadcast %5 : vector<8x1xf32> to vector<8x128xf32>
    %14 = arith.subf %1, %13 : vector<8x128xf32>
    %cst_4 = arith.constant 9.99999974E-6 : f32
    %15 = vector.broadcast %cst_4 : f32 to vector<8x1xf32>
    %16 = arith.addf %12, %15 : vector<8x1xf32>
    %17 = math.rsqrt %16 : vector<8x1xf32>
    %18 = vector.broadcast %17 : vector<8x1xf32> to vector<8x128xf32>
    %19 = arith.mulf %14, %18 : vector<8x128xf32>
    %c0_5 = arith.constant 0 : index
    %c0_6 = arith.constant 0 : index
    %20 = vector.load %arg2[%c0_5, %c0_6] : memref<1x128xf32, #tpu.memory_space<vmem>>, vector<1x128xf32>
    %21 = vector.broadcast %20 : vector<1x128xf32> to vector<8x128xf32>
    %22 = arith.mulf %19, %21 : vector<8x128xf32>
    %c0_7 = arith.constant 0 : index
    %c0_8 = arith.constant 0 : index
    %23 = vector.load %arg3[%c0_7, %c0_8] : memref<1x128xf32, #tpu.memory_space<vmem>>, vector<1x128xf32>
    %24 = vector.broadcast %23 : vector<1x128xf32> to vector<8x128xf32>
    %25 = arith.addf %22, %24 : vector<8x128xf32>
    %26 = arith.truncf %25 : vector<8x128xf32> to vector<8x128xbf16>
    %c0_9 = arith.constant 0 : index
    %c0_10 = arith.constant 0 : index
    %27 = vector.load %arg4[%c0_9, %c0_10] : memref<128x256xbf16, #tpu.memory_space<vmem>>, vector<128x256xbf16>
    %cst_11 = arith.constant dense<0.000000e+00> : vector<8x256xf32>
    %28 = tpu.matmul %26, %27, %cst_11 {dimension_numbers = #tpu.dot_dimension_numbers<[1], [0], [0], [1], [0, 0, 1, 1], [], []>} : vector<8x128xbf16>, vector<128x256xbf16>, vector<8x256xf32> -> vector<8x256xf32>
    %c0_12 = arith.constant 0 : index
    %c0_13 = arith.constant 0 : index
    %29 = vector.load %arg5[%c0_12, %c0_13] : memref<1x256xf32, #tpu.memory_space<vmem>>, vector<1x256xf32>
    %30 = vector.broadcast %29 : vector<1x256xf32> to vector<8x256xf32>
    %31 = arith.addf %28, %30 : vector<8x256xf32>
    %cst_14 = arith.constant 0.000000e+00 : f32
    %32 = vector.broadcast %cst_14 : f32 to vector<8x256xf32>
    %33 = arith.maximumf %31, %32 : vector<8x256xf32>
    %cst_15 = arith.constant dense<0.000000e+00> : vector<8xf32>
    %34 = vector.multi_reduction <add>, %33, %cst_15 [1] : vector<8x256xf32> to vector<8xf32>
    %35 = vector.shape_cast %34 : vector<8xf32> to vector<8x1xf32>
    %cst_16 = arith.constant 2.560000e+02 : f32
    %36 = vector.broadcast %cst_16 : f32 to vector<8x1xf32>
    %37 = arith.divf %35, %36 : vector<8x1xf32>
    %38 = vector.broadcast %37 : vector<8x1xf32> to vector<8x256xf32>
    %39 = arith.subf %33, %38 : vector<8x256xf32>
    %40 = arith.mulf %39, %39 : vector<8x256xf32>
    %cst_17 = arith.constant dense<0.000000e+00> : vector<8xf32>
    %41 = vector.multi_reduction <add>, %40, %cst_17 [1] : vector<8x256xf32> to vector<8xf32>
    %42 = vector.shape_cast %41 : vector<8xf32> to vector<8x1xf32>
    %cst_18 = arith.constant 2.560000e+02 : f32
    %43 = vector.broadcast %cst_18 : f32 to vector<8x1xf32>
    %44 = arith.divf %42, %43 : vector<8x1xf32>
    %45 = vector.broadcast %37 : vector<8x1xf32> to vector<8x256xf32>
    %46 = arith.subf %33, %45 : vector<8x256xf32>
    %cst_19 = arith.constant 9.99999974E-6 : f32
    %47 = vector.broadcast %cst_19 : f32 to vector<8x1xf32>
    %48 = arith.addf %44, %47 : vector<8x1xf32>
    %49 = math.rsqrt %48 : vector<8x1xf32>
    %50 = vector.broadcast %49 : vector<8x1xf32> to vector<8x256xf32>
    %51 = arith.mulf %46, %50 : vector<8x256xf32>
    %c0_20 = arith.constant 0 : index
    %c0_21 = arith.constant 0 : index
    %52 = vector.load %arg6[%c0_20, %c0_21] : memref<1x256xf32, #tpu.memory_space<vmem>>, vector<1x256xf32>
    %53 = vector.broadcast %52 : vector<1x256xf32> to vector<8x256xf32>
    %54 = arith.mulf %51, %53 : vector<8x256xf32>
    %c0_22 = arith.constant 0 : index
    %c0_23 = arith.constant 0 : index
    %55 = vector.load %arg7[%c0_22, %c0_23] : memref<1x256xf32, #tpu.memory_space<vmem>>, vector<1x256xf32>
    %56 = vector.broadcast %55 : vector<1x256xf32> to vector<8x256xf32>
    %57 = arith.addf %54, %56 : vector<8x256xf32>
    %58 = arith.truncf %57 : vector<8x256xf32> to vector<8x256xbf16>
    %c0_24 = arith.constant 0 : index
    %c0_25 = arith.constant 0 : index
    %59 = vector.load %arg8[%c0_24, %c0_25] : memref<256x128xbf16, #tpu.memory_space<vmem>>, vector<256x128xbf16>
    %cst_26 = arith.constant dense<0.000000e+00> : vector<8x128xf32>
    %60 = tpu.matmul %58, %59, %cst_26 {dimension_numbers = #tpu.dot_dimension_numbers<[1], [0], [0], [1], [0, 0, 1, 1], [], []>} : vector<8x256xbf16>, vector<256x128xbf16>, vector<8x128xf32> -> vector<8x128xf32>
    %c0_27 = arith.constant 0 : index
    %c0_28 = arith.constant 0 : index
    %61 = vector.load %arg9[%c0_27, %c0_28] : memref<1x128xf32, #tpu.memory_space<vmem>>, vector<1x128xf32>
    %62 = vector.broadcast %61 : vector<1x128xf32> to vector<8x128xf32>
    %63 = arith.addf %60, %62 : vector<8x128xf32>
    %c0_29 = arith.constant 0 : index
    %c0_30 = arith.constant 0 : index
    %64 = vector.load %arg10[%c0_29, %c0_30] : memref<8x128xf32, #tpu.memory_space<vmem>>, vector<8x128xf32>
    tpu.vector_store %arg10[%c0_29, %c0_30], %63 {strides = array<i32>} : memref<8x128xf32, #tpu.memory_space<vmem>>, vector<8x128xf32>,
    return
  }
  func.func @transform_0(%arg0: i32) -> (i32, i32) {
    %c0_i32 = arith.constant 0 : i32
    %c0_i32_0 = arith.constant 0 : i32
    return %arg0, %c0_i32 : i32, i32
  }
  func.func @transform_1(%arg0: i32) -> (i32, i32) {
    %c0_i32 = arith.constant 0 : i32
    %c0_i32_0 = arith.constant 0 : i32
    %c0_i32_1 = arith.constant 0 : i32
    return %c0_i32, %c0_i32_0 : i32, i32
  }
  func.func @transform_2(%arg0: i32) -> (i32, i32) {
    %c0_i32 = arith.constant 0 : i32
    %c0_i32_0 = arith.constant 0 : i32
    %c0_i32_1 = arith.constant 0 : i32
    return %c0_i32, %c0_i32_0 : i32, i32
  }
  func.func @transform_3(%arg0: i32) -> (i32, i32) {
    %c0_i32 = arith.constant 0 : i32
    %c0_i32_0 = arith.constant 0 : i32
    %c0_i32_1 = arith.constant 0 : i32
    return %c0_i32, %c0_i32_0 : i32, i32
  }
  func.func @transform_4(%arg0: i32) -> (i32, i32) {
    %c0_i32 = arith.constant 0 : i32
    %c0_i32_0 = arith.constant 0 : i32
    %c0_i32_1 = arith.constant 0 : i32
    return %c0_i32, %c0_i32_0 : i32, i32
  }
  func.func @transform_5(%arg0: i32) -> (i32, i32) {
    %c0_i32 = arith.constant 0 : i32
    %c0_i32_0 = arith.constant 0 : i32
    %c0_i32_1 = arith.constant 0 : i32
    return %c0_i32, %c0_i32_0 : i32, i32
  }
  func.func @transform_6(%arg0: i32) -> (i32, i32) {
    %c0_i32 = arith.constant 0 : i32
    %c0_i32_0 = arith.constant 0 : i32
    %c0_i32_1 = arith.constant 0 : i32
    return %c0_i32, %c0_i32_0 : i32, i32
  }
  func.func @transform_7(%arg0: i32) -> (i32, i32) {
    %c0_i32 = arith.constant 0 : i32
    %c0_i32_0 = arith.constant 0 : i32
    %c0_i32_1 = arith.constant 0 : i32
    return %c0_i32, %c0_i32_0 : i32, i32
  }
  func.func @transform_8(%arg0: i32) -> (i32, i32) {
    %c0_i32 = arith.constant 0 : i32
    %c0_i32_0 = arith.constant 0 : i32
    %c0_i32_1 = arith.constant 0 : i32
    return %c0_i32, %c0_i32_0 : i32, i32
  }
  func.func @transform_9(%arg0: i32) -> (i32, i32) {
    %c0_i32 = arith.constant 0 : i32
    %c0_i32_0 = arith.constant 0 : i32
    return %arg0, %c0_i32 : i32, i32
  }
}

</mosaic_0001>

<llo_original>
// kernel: tpu_custom_call.1
$region0: #{tpu_custom_call.1}
  #allocation0 [shape = 'u32[]', space=smem, size = 0x4, offset = 0x4, fixed_abs, tag = 'smem constant byte address 0x4 - core index']
  #allocation1 [shape = 'u32[72,128]{1,0:T(1,128)}', space=vmem, size = 0x9000, scoped, tag = 'internal scratch']
  %s0 = inlined_call_operand.hbm [shape: bf16[24,128], index: 0, kind: input, shape index: {}]
  %s1 = inlined_call_operand.hbm [shape: f32[1,128], index: 1, kind: input, shape index: {}]
  %s2 = inlined_call_operand.hbm [shape: f32[1,128], index: 2, kind: input, shape index: {}]
  %s3 = inlined_call_operand.hbm [shape: bf16[128,256], index: 3, kind: input, shape index: {}]
  %s4 = inlined_call_operand.vmem [shape: f32[1,256], index: 4, kind: input, shape index: {}]
  %s5 = inlined_call_operand.vmem [shape: f32[1,256], index: 5, kind: input, shape index: {}]
  %s6 = inlined_call_operand.hbm [shape: f32[1,256], index: 6, kind: input, shape index: {}]
  %s7 = inlined_call_operand.hbm [shape: bf16[256,128], index: 7, kind: input, shape index: {}]
  %s8 = inlined_call_operand.vmem [shape: f32[1,128], index: 8, kind: input, shape index: {}]
  %s9 = inlined_call_operand.hbm [shape: f32[24,128], index: 9, kind: output, shape index: {}]
  %s10 = sld [smem:[#allocation0]]
  $region93: #{tpu_custom_call.1} parent=0
    _
  %s12 = ssub.s32 1, %s10
  %s13 = scalar_select 0, %s12, %s10
  $region1: #{tpu_custom_call.1} parent=0
    #allocation2 [shape = 'u8[4096]{0}', space=vmem, size = 0x1000, scoped, tag = 'input window, operand 0']
    #allocation3 [shape = 's32[2]{0}', space=sflag, size = 0x8, scoped, tag = 'scoped memory for tpu_custom_call.1']
    #allocation4 [shape = 's32[2]{0}', space=sflag, size = 0x8, scoped, tag = 'scoped memory for tpu_custom_call.1']
    #allocation5 [shape = 'u8[512]{0}', space=vmem, size = 0x400, scoped, tag = 'input window, operand 1, single buffered']
    #allocation6 [shape = 's32[1]{0}', space=sflag, size = 0x4, scoped, tag = 'scoped memory for tpu_custom_call.1']
    #allocation7 [shape = 'u8[512]{0}', space=vmem, size = 0x400, scoped, tag = 'input window, operand 2, single buffered']
    #allocation8 [shape = 'u8[65536]{0}', space=vmem, size = 0x10000, scoped, tag = 'input window, operand 3, single buffered']
    #allocation9 [shape = 's32[1]{0}', space=sflag, size = 0x4, scoped, tag = 'scoped memory for tpu_custom_call.1']
    #allocation10 [shape = 'u8[1024]{0}', space=vmem, size = 0x400, scoped, tag = 'input window, operand 6, single buffered']
    #allocation11 [shape = 'u8[65536]{0}', space=vmem, size = 0x10000, scoped, tag = 'input window, operand 7, single buffered']
    #allocation12 [shape = 's32[1]{0}', space=sflag, size = 0x4, scoped, tag = 'scoped memory for tpu_custom_call.1']
    #allocation13 [shape = 'u8[8192]{0}', space=vmem, size = 0x2000, scoped, tag = 'output window, operand 0']
    %14 = vsyncpa [#allocation3], 0
    %s15 = scalar_lea.sflag [#allocation3], 1
    %16 = vsyncpa %s15, 0
    %17 = vsyncpa [#allocation6], 0
    %18 = vsyncpa [#allocation9], 0
    %19 = vsyncpa [#allocation12], 0
    %20 = vsyncpa [#allocation4], 0
    %s21 = scalar_lea.sflag [#allocation4], 1
    %22 = vsyncpa %s21, 0
    loop: start=0, step=1, limit=5
    $region2: #{tpu_custom_call.1} parent=1 // loop_pre_header
      _
    $region3: #{tpu_custom_call.1} parent=1 // loop_header
      %s24 = sphi 0, %s28
      %p25 = scmp.ge.s32.totalorder %s24, 5
      %s34 = sphi 0, %s36
      %s37 = sphi 0, %s34
      %s38 = sphi 0, %s37
      %s54 = sphi 0, %s38
      %s58 = sphi 0, %s58
      %s60 = sphi 0, %s58
      %s61 = sphi 0, %s60
      %s75 = sphi 0, %s61
      %s79 = sphi 0, %s79
      %s81 = sphi 0, %s79
      %s82 = sphi 0, %s81
      %s96 = sphi 0, %s82
      %s100 = sphi 0, %s100
      %s102 = sphi 0, %s100
      %s103 = sphi 0, %s102
      %s117 = sphi 0, %s103
      %s121 = sphi 0, %s121
      %s123 = sphi 0, %s121
      %s124 = sphi 0, %s123
      %s138 = sphi 0, %s124
      %s142 = sphi 0, %s142
      %s144 = sphi 0, %s142
      %s145 = sphi 0, %s144
      %s159 = sphi 0, %s145
      %s163 = sphi 0, %s163
      %s165 = sphi 0, %s163
      %s166 = sphi 0, %s165
      %s180 = sphi 0, %s166
      %s184 = sphi 0, %s184
      %s186 = sphi 0, %s184
      %s187 = sphi 0, %s186
      %s201 = sphi 0, %s187
      %s205 = sphi 0, %s205
      %s207 = sphi 0, %s205
      %s208 = sphi 0, %s207
      %s222 = sphi 0, %s208
      %s228 = sphi 0, %s230
      %s231 = sphi 0, %s228
      %s232 = sphi 0, %s231
      %s248 = sphi 0, %s232
    $region4: #{tpu_custom_call.1} parent=1 // loop_header_branch
      %27 = sbr.rel (%p25) target = $region8
    $region5: #{tpu_custom_call.1} parent=1 // loop_body
      %s29 = ssub.s32 %s24, 1
      %s30 = ssub.s32 %s24, 2
      %s31 = sadd.s32 %s24, 1
      %s32 = ssub.s32 %s24, %s31
      %p33 = scmp.eq.s32.totalorder %s32, 0
      %s35 = sadd.s32 %s34, 1
      %s36 = scalar_select %p33, %s34, %s35
      %p39 = pneg %p33
      %p40 = scmp.eq.s32.totalorder %s24, 2
      %p41 = por %p39, %p40
      %p42 = scmp.ne.s32.totalorder %s34, %s37
      %p43 = scmp.eq.s32.totalorder %s24, 0
      %p44 = por %p42, %p43
      %p45 = scmp.ne.s32.totalorder %s34, %s37
      %p46 = scmp.eq.s32.totalorder %s29, 2
      %p47 = por %p45, %p46
      %p48 = scmp.ne.s32.totalorder %s37, %s38
      %p49 = scmp.eq.s32.totalorder %s29, 0
      %p50 = por %p48, %p49
      %p51 = scmp.ne.s32.totalorder %s37, %s38
      %p52 = scmp.eq.s32.totalorder %s30, 2
      %p53 = por %p51, %p52
      %p55 = scmp.ne.s32.totalorder %s38, %s54
      %p56 = scmp.eq.s32.totalorder %s30, 0
      %p57 = por %p55, %p56
      %s59 = sadd.s32 %s58, 1
      %p62 = scmp.eq.s32.totalorder %s24, 2
      %p63 = scmp.ne.s32.totalorder %s58, %s60
      %p64 = scmp.eq.s32.totalorder %s24, 0
      %p65 = por %p63, %p64
      %p66 = scmp.ne.s32.totalorder %s58, %s60
      %p67 = scmp.eq.s32.totalorder %s29, 2
      %p68 = por %p66, %p67
      %p69 = scmp.ne.s32.totalorder %s60, %s61
      %p70 = scmp.eq.s32.totalorder %s29, 0
      %p71 = por %p69, %p70
      %p72 = scmp.ne.s32.totalorder %s60, %s61
      %p73 = scmp.eq.s32.totalorder %s30, 2
      %p74 = por %p72, %p73
      %p76 = scmp.ne.s32.totalorder %s61, %s75
      %p77 = scmp.eq.s32.totalorder %s30, 0
      %p78 = por %p76, %p77
      %s80 = sadd.s32 %s79, 1
      %p83 = scmp.eq.s32.totalorder %s24, 2
      %p84 = scmp.ne.s32.totalorder %s79, %s81
      %p85 = scmp.eq.s32.totalorder %s24, 0
      %p86 = por %p84, %p85
      %p87 = scmp.ne.s32.totalorder %s79, %s81
      %p88 = scmp.eq.s32.totalorder %s29, 2
      %p89 = por %p87, %p88
      %p90 = scmp.ne.s32.totalorder %s81, %s82
      %p91 = scmp.eq.s32.totalorder %s29, 0
      %p92 = por %p90, %p91
      %p93 = scmp.ne.s32.totalorder %s81, %s82
      %p94 = scmp.eq.s32.totalorder %s30, 2
      %p95 = por %p93, %p94
      %p97 = scmp.ne.s32.totalorder %s82, %s96
      %p98 = scmp.eq.s32.totalorder %s30, 0
      %p99 = por %p97, %p98
      %s101 = sadd.s32 %s100, 1
      %p104 = scmp.eq.s32.totalorder %s24, 2
      %p105 = scmp.ne.s32.totalorder %s100, %s102
      %p106 = scmp.eq.s32.totalorder %s24, 0
      %p107 = por %p105, %p106
      %p108 = scmp.ne.s32.totalorder %s100, %s102
      %p109 = scmp.eq.s32.totalorder %s29, 2
      %p110 = por %p108, %p109
      %p111 = scmp.ne.s32.totalorder %s102, %s103
      %p112 = scmp.eq.s32.totalorder %s29, 0
      %p113 = por %p111, %p112
      %p114 = scmp.ne.s32.totalorder %s102, %s103
      %p115 = scmp.eq.s32.totalorder %s30, 2
      %p116 = por %p114, %p115
      %p118 = scmp.ne.s32.totalorder %s103, %s117
      %p119 = scmp.eq.s32.totalorder %s30, 0
      %p120 = por %p118, %p119
      %s122 = sadd.s32 %s121, 1
      %p125 = scmp.eq.s32.totalorder %s24, 2
      %p126 = scmp.ne.s32.totalorder %s121, %s123
      %p127 = scmp.eq.s32.totalorder %s24, 0
      %p128 = por %p126, %p127
      %p129 = scmp.ne.s32.totalorder %s121, %s123
      %p130 = scmp.eq.s32.totalorder %s29, 2
      %p131 = por %p129, %p130
      %p132 = scmp.ne.s32.totalorder %s123, %s124
      %p133 = scmp.eq.s32.totalorder %s29, 0
      %p134 = por %p132, %p133
      %p135 = scmp.ne.s32.totalorder %s123, %s124
      %p136 = scmp.eq.s32.totalorder %s30, 2
      %p137 = por %p135, %p136
      %p139 = scmp.ne.s32.totalorder %s124, %s138
      %p140 = scmp.eq.s32.totalorder %s30, 0
      %p141 = por %p139, %p140
      %s143 = sadd.s32 %s142, 1
      %p146 = scmp.eq.s32.totalorder %s24, 2
      %p147 = scmp.ne.s32.totalorder %s142, %s144
      %p148 = scmp.eq.s32.totalorder %s24, 0
      %p149 = por %p147, %p148
      %p150 = scmp.ne.s32.totalorder %s142, %s144
      %p151 = scmp.eq.s32.totalorder %s29, 2
      %p152 = por %p150, %p151
      %p153 = scmp.ne.s32.totalorder %s144, %s145
      %p154 = scmp.eq.s32.totalorder %s29, 0
      %p155 = por %p153, %p154
      %p156 = scmp.ne.s32.totalorder %s144, %s145
      %p157 = scmp.eq.s32.totalorder %s30, 2
      %p158 = por %p156, %p157
      %p160 = scmp.ne.s32.totalorder %s145, %s159
      %p161 = scmp.eq.s32.totalorder %s30, 0
      %p162 = por %p160, %p161
      %s164 = sadd.s32 %s163, 1
      %p167 = scmp.eq.s32.totalorder %s24, 2
      %p168 = scmp.ne.s32.totalorder %s163, %s165
      %p169 = scmp.eq.s32.totalorder %s24, 0
      %p170 = por %p168, %p169
      %p171 = scmp.ne.s32.totalorder %s163, %s165
      %p172 = scmp.eq.s32.totalorder %s29, 2
      %p173 = por %p171, %p172
      %p174 = scmp.ne.s32.totalorder %s165, %s166
      %p175 = scmp.eq.s32.totalorder %s29, 0
      %p176 = por %p174, %p175
      %p177 = scmp.ne.s32.totalorder %s165, %s166
      %p178 = scmp.eq.s32.totalorder %s30, 2
      %p179 = por %p177, %p178
      %p181 = scmp.ne.s32.totalorder %s166, %s180
      %p182 = scmp.eq.s32.totalorder %s30, 0
      %p183 = por %p181, %p182
      %s185 = sadd.s32 %s184, 1
      %p188 = scmp.eq.s32.totalorder %s24, 2
      %p189 = scmp.ne.s32.totalorder %s184, %s186
      %p190 = scmp.eq.s32.totalorder %s24, 0
      %p191 = por %p189, %p190
      %p192 = scmp.ne.s32.totalorder %s184, %s186
      %p193 = scmp.eq.s32.totalorder %s29, 2
      %p194 = por %p192, %p193
      %p195 = scmp.ne.s32.totalorder %s186, %s187
      %p196 = scmp.eq.s32.totalorder %s29, 0
      %p197 = por %p195, %p196
      %p198 = scmp.ne.s32.totalorder %s186, %s187
      %p199 = scmp.eq.s32.totalorder %s30, 2
      %p200 = por %p198, %p199
      %p202 = scmp.ne.s32.totalorder %s187, %s201
      %p203 = scmp.eq.s32.totalorder %s30, 0
      %p204 = por %p202, %p203
      %s206 = sadd.s32 %s205, 1
      %p209 = scmp.eq.s32.totalorder %s24, 2
      %p210 = scmp.ne.s32.totalorder %s205, %s207
      %p211 = scmp.eq.s32.totalorder %s24, 0
      %p212 = por %p210, %p211
      %p213 = scmp.ne.s32.totalorder %s205, %s207
      %p214 = scmp.eq.s32.totalorder %s29, 2
      %p215 = por %p213, %p214
      %p216 = scmp.ne.s32.totalorder %s207, %s208
      %p217 = scmp.eq.s32.totalorder %s29, 0
      %p218 = por %p216, %p217
      %p219 = scmp.ne.s32.totalorder %s207, %s208
      %p220 = scmp.eq.s32.totalorder %s30, 2
      %p221 = por %p219, %p220
      %p223 = scmp.ne.s32.totalorder %s208, %s222
      %p224 = scmp.eq.s32.totalorder %s30, 0
      %p225 = por %p223, %p224
      %s226 = ssub.s32 %s24, %s31
      %p227 = scmp.eq.s32.totalorder %s226, 0
      %s229 = sadd.s32 %s228, 1
      %s230 = scalar_select %p227, %s228, %s229
      %p233 = pneg %p227
      %p234 = scmp.eq.s32.totalorder %s24, 2
      %p235 = por %p233, %p234
      %p236 = scmp.ne.s32.totalorder %s228, %s231
      %p237 = scmp.eq.s32.totalorder %s24, 0
      %p238 = por %p236, %p237
      %p239 = scmp.ne.s32.totalorder %s228, %s231
      %p240 = scmp.eq.s32.totalorder %s29, 2
      %p241 = por %p239, %p240
      %p242 = scmp.ne.s32.totalorder %s231, %s232
      %p243 = scmp.eq.s32.totalorder %s29, 0
      %p244 = por %p242, %p243
      %p245 = scmp.ne.s32.totalorder %s231, %s232
      %p246 = scmp.eq.s32.totalorder %s30, 2
      %p247 = por %p245, %p246
      %p249 = scmp.ne.s32.totalorder %s232, %s248
      %p250 = scmp.eq.s32.totalorder %s30, 0
      %p251 = por %p249, %p250
      %p252 = scmp.le.s32.totalorder 1, %s24
      %p253 = scmp.lt.s32.totalorder %s24, 4
      %p254 = pnand %p252, %p253
      %p255 = pneg %p254
      // Predicated region
      $region9: #{tpu_custom_call.1} parent=5 // pred_check
        _
      $region10: #{tpu_custom_call.1} parent=5 // pred_check_branch
        %257 = sbr.rel (%p254) target = $region12
      $region11: #{tpu_custom_call.1} parent=5 // pred_region
        %s258 = ssub.s32 %s24, 1
        // Predicated region
        $region13: #{tpu_custom_call.1} parent=11 // pred_check
          %p259 = pneg %p71
        $region14: #{tpu_custom_call.1} parent=11 // pred_check_branch
          %261 = sbr.rel (%p259) target = $region16
        $region15: #{tpu_custom_call.1} parent=11 // pred_region
          %263 = vsyncadd [#allocation6], 0
          %s265 = sshll.u32 %s1, 4
          %s266 = int_to_ptr.hbm [resolvable:$true] %s265
          %s267 = sshll.u32 [#allocation5], 4
          %s268 = int_to_ptr.vmem [resolvable:$true] %s267
          %270 = dma.hbm_to_vmem [thread:$0]  %s266, 16, %s268, [#allocation6]
        $region16: #{tpu_custom_call.1} parent=11 // pred_fallthru
          _
        // Predicated region
        $region17: #{tpu_custom_call.1} parent=11 // pred_check
          %p271 = pneg %p92
        $region18: #{tpu_custom_call.1} parent=11 // pred_check_branch
          %273 = sbr.rel (%p271) target = $region20
        $region19: #{tpu_custom_call.1} parent=11 // pred_region
          %275 = vsyncadd [#allocation6], 0
          %s277 = sshll.u32 %s2, 4
          %s278 = int_to_ptr.hbm [resolvable:$true] %s277
          %s279 = sshll.u32 [#allocation7], 4
          %s280 = int_to_ptr.vmem [resolvable:$true] %s279
          %282 = dma.hbm_to_vmem [thread:$0]  %s278, 16, %s280, [#allocation6]
        $region20: #{tpu_custom_call.1} parent=11 // pred_fallthru
          _
        // Predicated region
        $region21: #{tpu_custom_call.1} parent=11 // pred_check
          %p283 = pneg %p113
        $region22: #{tpu_custom_call.1} parent=11 // pred_check_branch
          %285 = sbr.rel (%p283) target = $region24
        $region23: #{tpu_custom_call.1} parent=11 // pred_region
          %287 = vsyncadd [#allocation9], 0
          %s288 = sshll.u32 %s3, 4
          %s289 = int_to_ptr.hbm [resolvable:$true] %s288
          %s290 = sshll.u32 [#allocation8], 4
          %s291 = int_to_ptr.vmem [resolvable:$true] %s290
          %296 = dma.hbm_to_vmem [thread:$0]  %s289, 2048, %s291, [#allocation9], 128, 128, 8
        $region24: #{tpu_custom_call.1} parent=11 // pred_fallthru
          _
        // Predicated region
        $region25: #{tpu_custom_call.1} parent=11 // pred_check
          %p297 = pneg %p134
        $region26: #{tpu_custom_call.1} parent=11 // pred_check_branch
          %299 = sbr.rel (%p297) target = $region28
        $region27: #{tpu_custom_call.1} parent=11 // pred_region
          _
        $region28: #{tpu_custom_call.1} parent=11 // pred_fallthru
          _
        // Predicated region
        $region29: #{tpu_custom_call.1} parent=11 // pred_check
          %p300 = pneg %p155
        $region30: #{tpu_custom_call.1} parent=11 // pred_check_branch
          %302 = sbr.rel (%p300) target = $region32
        $region31: #{tpu_custom_call.1} parent=11 // pred_region
          _
        $region32: #{tpu_custom_call.1} parent=11 // pred_fallthru
          _
        // Predicated region
        $region33: #{tpu_custom_call.1} parent=11 // pred_check
          %p303 = pneg %p176
        $region34: #{tpu_custom_call.1} parent=11 // pred_check_branch
          %305 = sbr.rel (%p303) target = $region36
        $region35: #{tpu_custom_call.1} parent=11 // pred_region
          %307 = vsyncadd [#allocation9], 0
          %s309 = sshll.u32 %s6, 4
          %s310 = int_to_ptr.hbm [resolvable:$true] %s309
          %s311 = sshll.u32 [#allocation10], 4
          %s312 = int_to_ptr.vmem [resolvable:$true] %s311
          %314 = dma.hbm_to_vmem [thread:$0]  %s310, 32, %s312, [#allocation9]
        $region36: #{tpu_custom_call.1} parent=11 // pred_fallthru
          _
        // Predicated region
        $region37: #{tpu_custom_call.1} parent=11 // pred_check
          %p315 = pneg %p197
        $region38: #{tpu_custom_call.1} parent=11 // pred_check_branch
          %317 = sbr.rel (%p315) target = $region40
        $region39: #{tpu_custom_call.1} parent=11 // pred_region
          %319 = vsyncadd [#allocation12], 0
          %s320 = sshll.u32 %s7, 4
          %s321 = int_to_ptr.hbm [resolvable:$true] %s320
          %s322 = sshll.u32 [#allocation11], 4
          %s323 = int_to_ptr.vmem [resolvable:$true] %s322
          %328 = dma.hbm_to_vmem [thread:$0]  %s321, 2048, %s323, [#allocation12], 64, 64, 4
        $region40: #{tpu_custom_call.1} parent=11 // pred_fallthru
          _
        // Predicated region
        $region41: #{tpu_custom_call.1} parent=11 // pred_check
          %p329 = pneg %p218
        $region42: #{tpu_custom_call.1} parent=11 // pred_check_branch
          %331 = sbr.rel (%p329) target = $region44
        $region43: #{tpu_custom_call.1} parent=11 // pred_region
          _
        $region44: #{tpu_custom_call.1} parent=11 // pred_fallthru
          _
      $region12: #{tpu_custom_call.1} parent=5 // pred_fallthru
        _
      %p332 = scmp.lt.s32.totalorder %s24, 3
      // Predicated region
      $region45: #{tpu_custom_call.1} parent=5 // pred_check
        %p333 = pneg %p332
      $region46: #{tpu_custom_call.1} parent=5 // pred_check_branch
        %335 = sbr.rel (%p333) target = $region48
      $region47: #{tpu_custom_call.1} parent=5 // pred_region
        // Predicated region
        $region49: #{tpu_custom_call.1} parent=47 // pred_check
          %p336 = pneg %p44
        $region50: #{tpu_custom_call.1} parent=47 // pred_check_branch
          %338 = sbr.rel (%p336) target = $region52
        $region51: #{tpu_custom_call.1} parent=47 // pred_region
          %s339 = sand.u32 %s34, 1
          %s340 = scalar_lea.sflag [#allocation3], %s339
          %s341 = sand.u32 %s34, 1
          %s342 = smul.addr %s341, 4
          %s343 = scalar_lea.vmem [#allocation2], %s342
          %345 = vsyncadd %s340, 0
          %s346 = smul.addr %s24, 4
          %s347 = scalar_lea.hbm %s0, %s346
          %s349 = sshll.u32 %s347, 4
          %s350 = int_to_ptr.hbm [resolvable:$true] %s349
          %s351 = sshll.u32 %s343, 4
          %s352 = int_to_ptr.vmem [resolvable:$true] %s351
          %354 = dma.hbm_to_vmem [thread:$0]  %s350, 64, %s352, %s340
        $region52: #{tpu_custom_call.1} parent=47 // pred_fallthru
          _
      $region48: #{tpu_custom_call.1} parent=5 // pred_fallthru
        _
      %p355 = scmp.le.s32.totalorder 1, %s24
      %p356 = scmp.lt.s32.totalorder %s24, 4
      %p357 = pnand %p355, %p356
      %p358 = pneg %p357
      // Predicated region
      $region53: #{tpu_custom_call.1} parent=5 // pred_check
        _
      $region54: #{tpu_custom_call.1} parent=5 // pred_check_branch
        %360 = sbr.rel (%p357) target = $region56
      $region55: #{tpu_custom_call.1} parent=5 // pred_region
        %s361 = ssub.s32 %s24, 1
        %s362 = sand.u32 %s37, 1
        %s363 = scalar_lea.sflag [#allocation3], %s362
        %s364 = sand.u32 %s37, 1
        %s365 = smul.addr %s364, 4
        %s366 = scalar_lea.vmem [#allocation2], %s365
        // Predicated region
        $region57: #{tpu_custom_call.1} parent=55 // pred_check
          %p367 = pneg %p50
        $region58: #{tpu_custom_call.1} parent=55 // pred_check_branch
          %369 = sbr.rel (%p367) target = $region60
        $region59: #{tpu_custom_call.1} parent=55 // pred_region
          %371 = dma.done %s363, 64
        $region60: #{tpu_custom_call.1} parent=55 // pred_fallthru
          _
        // Predicated region
        $region61: #{tpu_custom_call.1} parent=55 // pred_check
          %p372 = pneg %p71
        $region62: #{tpu_custom_call.1} parent=55 // pred_check_branch
          %374 = sbr.rel (%p372) target = $region64
        $region63: #{tpu_custom_call.1} parent=55 // pred_region
          %376 = dma.done [#allocation6], 16
        $region64: #{tpu_custom_call.1} parent=55 // pred_fallthru
          _
        // Predicated region
        $region65: #{tpu_custom_call.1} parent=55 // pred_check
          %p377 = pneg %p92
        $region66: #{tpu_custom_call.1} parent=55 // pred_check_branch
          %379 = sbr.rel (%p377) target = $region68
        $region67: #{tpu_custom_call.1} parent=55 // pred_region
          %381 = dma.done [#allocation6], 16
        $region68: #{tpu_custom_call.1} parent=55 // pred_fallthru
          _
        // Predicated region
        $region69: #{tpu_custom_call.1} parent=55 // pred_check
          %p382 = pneg %p113
        $region70: #{tpu_custom_call.1} parent=55 // pred_check_branch
          %384 = sbr.rel (%p382) target = $region72
        $region71: #{tpu_custom_call.1} parent=55 // pred_region
          %386 = dma.done [#allocation9], 2048
        $region72: #{tpu_custom_call.1} parent=55 // pred_fallthru
          _
        // Predicated region
        $region73: #{tpu_custom_call.1} parent=55 // pred_check
          %p387 = pneg %p176
        $region74: #{tpu_custom_call.1} parent=55 // pred_check_branch
          %389 = sbr.rel (%p387) target = $region76
        $region75: #{tpu_custom_call.1} parent=55 // pred_region
          %391 = dma.done [#allocation9], 32
        $region76: #{tpu_custom_call.1} parent=55 // pred_fallthru
          _
        // Predicated region
        $region77: #{tpu_custom_call.1} parent=55 // pred_check
          %p392 = pneg %p197
        $region78: #{tpu_custom_call.1} parent=55 // pred_check_branch
          %394 = sbr.rel (%p392) target = $region80
        $region79: #{tpu_custom_call.1} parent=55 // pred_region
          %396 = dma.done [#allocation12], 2048
        $region80: #{tpu_custom_call.1} parent=55 // pred_fallthru
          _
        %s397 = sand.u32 %s37, 1
        %s398 = scalar_lea.sflag [#allocation3], %s397
        %s399 = sand.u32 %s37, 1
        %s400 = smul.addr %s399, 4
        %s401 = scalar_lea.vmem [#allocation2], %s400
        %p402 = pneg %p50
        %p403 = pneg %p47
        %p404 = pneg %p71
        %p405 = pneg %p68
        %p406 = pneg %p92
        %p407 = pneg %p89
        %p408 = pneg %p113
        %p409 = pneg %p110
        %p410 = pneg %p134
        %p411 = pneg %p131
        %p412 = pneg %p155
        %p413 = pneg %p152
        %p414 = pneg %p176
        %p415 = pneg %p173
        %p416 = pneg %p197
        %p417 = pneg %p194
        %p418 = pneg %p218
        %p419 = pneg %p215
        %p420 = pneg %p244
        %p421 = pneg %p241
        %s422 = sand.u32 %s231, 1
        %s423 = scalar_lea.sflag [#allocation4], %s422
        %s424 = sand.u32 %s231, 1
        %s425 = smul.addr %s424, 8
        %s426 = scalar_lea.vmem [#allocation13], %s425
        %v427 = vld [vmem:[%s366] sm:$0xf]
        %v428 = vunpack.c.l.bf16 %v427
        %429 = vadd.xlane.f32.xlu0 %v428
        %v430 = vpop.xlane.xlu0 %429
        %v431 = vrcp.pop 128.0
        %v432 = vmul.f32 128.0, %v431
        %v433 = vsub.f32 1.0, %v432
        %v434 = vmul.f32 %v431, %v433
        %v435 = vadd.f32 %v431, %v434
        %vm436 = vweird.f32 %v431
        %v437 = vsel %vm436, %v431, %v435
        %v438 = vmul.f32 %v430, %v437
        %v439 = vsub.f32 %v428, %v438
        %v440 = vmul.f32 %v439, %v439
        %441 = vadd.xlane.f32.xlu0 %v440
        %v442 = vpop.xlane.xlu0 %441
        %v443 = vmul.f32 %v442, %v437
        %v444 = vadd.f32 %v443, 1e-05
        %v445 = vrsqrt.pop %v444
        %v446 = vmul.f32 %v445, %v444
        %v447 = vmul.f32 %v446, %v445
        %v448 = vmul.f32 0.5, %v447
        %v449 = vsub.f32 1.5, %v448
        %v450 = vmul.f32 %v445, %v449
        %vm451 = vweird.f32 %v444
        %vm452 = vweird.f32 %v445
        %vm453 = vmor %vm451, %vm452
        %v454 = vsel %vm453, %v445, %v450
        %v455 = vmul.f32 %v439, %v454
        %v456 = vld [vmem:[#allocation5] sm:$0x1]
        %v458 = vperm.slane %v456, 0
        %v460 = vmul.f32 %v455, %v458
        %v461 = vld [vmem:[#allocation7] sm:$0x1]
        %v463 = vperm.slane %v461, 0
        %v465 = vadd.f32 %v460, %v463
        %v466 = vpack.c.bf16 %v465, %v465
        %v467 = vld [vmem:[#allocation8] sm:$0xff]
        %v468 = vld [vmem:[#allocation8 + $0x8] sm:$0xff]
        %v469 = vld [vmem:[#allocation8 + $0x10] sm:$0xff]
        %v470 = vld [vmem:[#allocation8 + $0x18] sm:$0xff]
        %v471 = vld [vmem:[#allocation8 + $0x20] sm:$0xff]
        %v472 = vld [vmem:[#allocation8 + $0x28] sm:$0xff]
        %v473 = vld [vmem:[#allocation8 + $0x30] sm:$0xff]
        %v474 = vld [vmem:[#allocation8 + $0x38] sm:$0xff]
        %v475 = vld [vmem:[#allocation8 + $0x40] sm:$0xff]
        %v476 = vld [vmem:[#allocation8 + $0x48] sm:$0xff]
        %v477 = vld [vmem:[#allocation8 + $0x50] sm:$0xff]
        %v478 = vld [vmem:[#allocation8 + $0x58] sm:$0xff]
        %v479 = vld [vmem:[#allocation8 + $0x60] sm:$0xff]
        %v480 = vld [vmem:[#allocation8 + $0x68] sm:$0xff]
        %v481 = vld [vmem:[#allocation8 + $0x70] sm:$0xff]
        %v482 = vld [vmem:[#allocation8 + $0x78] sm:$0xff]
        %v483 = vld [vmem:[%s4] sm:$0x3]
        %v485 = vperm.slane %v483, 0
        %v486 = vperm.slane %v483, 1
        %v505 = vunpack.c.l.b16 %v467
        %v506 = vunpack.c.h.b16 %v467
        %v507 = vunpack.c.l.b16 %v468
        %v508 = vunpack.c.h.b16 %v468
        %v509 = vunpack.c.l.b16 %v469
        %v510 = vunpack.c.h.b16 %v469
        %v511 = vunpack.c.l.b16 %v470
        %v512 = vunpack.c.h.b16 %v470
        %v513 = vunpack.c.l.b16 %v471
        %v514 = vunpack.c.h.b16 %v471
        %v515 = vunpack.c.l.b16 %v472
        %v516 = vunpack.c.h.b16 %v472
        %v517 = vunpack.c.l.b16 %v473
        %v518 = vunpack.c.h.b16 %v473
        %v519 = vunpack.c.l.b16 %v474
        %v520 = vunpack.c.h.b16 %v474
        %v521 = vunpack.c.l.b16 %v475
        %v522 = vunpack.c.h.b16 %v475
        %v523 = vunpack.c.l.b16 %v476
        %v524 = vunpack.c.h.b16 %v476
        %v525 = vunpack.c.l.b16 %v477
        %v526 = vunpack.c.h.b16 %v477
        %v527 = vunpack.c.l.b16 %v478
        %v528 = vunpack.c.h.b16 %v478
        %v529 = vunpack.c.l.b16 %v479
        %v530 = vunpack.c.h.b16 %v479
        %v531 = vunpack.c.l.b16 %v480
        %v532 = vunpack.c.h.b16 %v480
        %v533 = vunpack.c.l.b16 %v481
        %v534 = vunpack.c.h.b16 %v481
        %v535 = vunpack.c.l.b16 %v482
        %v536 = vunpack.c.h.b16 %v482
        %v537 = vpack.c.b16 %v507, %v505
        %v538 = vpack.c.b16 %v508, %v506
        %v539 = vpack.c.b16 %v511, %v509
        %v540 = vpack.c.b16 %v512, %v510
        %v541 = vpack.c.b16 %v515, %v513
        %v542 = vpack.c.b16 %v516, %v514
        %v543 = vpack.c.b16 %v519, %v517
        %v544 = vpack.c.b16 %v520, %v518
        %v545 = vpack.c.b16 %v523, %v521
        %v546 = vpack.c.b16 %v524, %v522
        %v547 = vpack.c.b16 %v527, %v525
        %v548 = vpack.c.b16 %v528, %v526
        %v549 = vpack.c.b16 %v531, %v529
        %v550 = vpack.c.b16 %v532, %v530
        %v551 = vpack.c.b16 %v535, %v533
        %v552 = vpack.c.b16 %v536, %v534
        %569 = vmatpush.bf16.msra.mxu0 %v551
        %570 = vmatpush.bf16.msra.mxu0 %v549
        %571 = vmatpush.bf16.msra.mxu0 %v547
        %572 = vmatpush.bf16.msra.mxu0 %v545
        %573 = vmatpush.bf16.msra.mxu0 %v543
        %574 = vmatpush.bf16.msra.mxu0 %v541
        %575 = vmatpush.bf16.msra.mxu0 %v539
        %576 = vmatpush.bf16.msra.mxu0 %v537
        %577 = vmatmul.bf16.gmra.mxu0 %v466
        %v578 = vpop.f32.mrf.mxu0
        %v579 = vadd.f32 %v485, %v578
        %v580 = vpop.f32.mrf.mxu0
        %581 = vdwg.mxu0
        %582 = vmatpush.bf16.msra.mxu0 %v552
        %583 = vmatpush.bf16.msra.mxu0 %v550
        %584 = vmatpush.bf16.msra.mxu0 %v548
        %585 = vmatpush.bf16.msra.mxu0 %v546
        %586 = vmatpush.bf16.msra.mxu0 %v544
        %587 = vmatpush.bf16.msra.mxu0 %v542
        %588 = vmatpush.bf16.msra.mxu0 %v540
        %589 = vmatpush.bf16.msra.mxu0 %v538
        %590 = vmatmul.bf16.gmra.mxu0 %v466
        %v591 = vpop.f32.mrf.mxu0
        %v592 = vadd.f32 %v486, %v591
        %v593 = vpop.f32.mrf.mxu0
        %594 = vdwg.mxu0
        %v595 = vmax.f32 %v579, 0.0
        %v596 = vmax.f32 %v592, 0.0
        %v597 = vadd.f32 %v595, %v596
        %598 = vadd.xlane.f32.xlu0 %v597
        %v599 = vpop.xlane.xlu0 %598
        %v600 = vrcp.pop 256.0
        %v601 = vmul.f32 256.0, %v600
        %v602 = vsub.f32 1.0, %v601
        %v603 = vmul.f32 %v600, %v602
        %v604 = vadd.f32 %v600, %v603
        %vm605 = vweird.f32 %v600
        %v606 = vsel %vm605, %v600, %v604
        %v607 = vmul.f32 %v599, %v606
        %v608 = vsub.f32 %v595, %v607
        %v609 = vsub.f32 %v596, %v607
        %v610 = vmul.f32 %v608, %v608
        %v611 = vmul.f32 %v609, %v609
        %v612 = vadd.f32 %v610, %v611
        %613 = vadd.xlane.f32.xlu0 %v612
        %v614 = vpop.xlane.xlu0 %613
        %v615 = vmul.f32 %v614, %v606
        %v616 = vadd.f32 %v615, 1e-05
        %v617 = vrsqrt.pop %v616
        %v618 = vmul.f32 %v617, %v616
        %v619 = vmul.f32 %v618, %v617
        %v620 = vmul.f32 0.5, %v619
        %v621 = vsub.f32 1.5, %v620
        %v622 = vmul.f32 %v617, %v621
        %vm623 = vweird.f32 %v616
        %vm624 = vweird.f32 %v617
        %vm625 = vmor %vm623, %vm624
        %v626 = vsel %vm625, %v617, %v622
        %v627 = vmul.f32 %v608, %v626
        %v628 = vmul.f32 %v609, %v626
        %v629 = vld [vmem:[%s5] sm:$0x3]
        %v631 = vperm.slane %v629, 0
        %v632 = vperm.slane %v629, 1
        %v635 = vmul.f32 %v627, %v631
        %v636 = vmul.f32 %v628, %v632
        %v637 = vld [vmem:[#allocation10] sm:$0x3]
        %v639 = vperm.slane %v637, 0
        %v640 = vperm.slane %v637, 1
        %v643 = vadd.f32 %v635, %v639
        %v644 = vadd.f32 %v636, %v640
        %v645 = vpack.c.bf16 %v643, %v643
        %v646 = vpack.c.bf16 %v644, %v644
        %v647 = vld [vmem:[#allocation11] sm:$0xf]
        %v648 = vld [vmem:[#allocation11 + $0x4] sm:$0xf]
        %v649 = vld [vmem:[#allocation11 + $0x8] sm:$0xf]
        %v650 = vld [vmem:[#allocation11 + $0xc] sm:$0xf]
        %v651 = vld [vmem:[#allocation11 + $0x10] sm:$0xf]
        %v652 = vld [vmem:[#allocation11 + $0x14] sm:$0xf]
        %v653 = vld [vmem:[#allocation11 + $0x18] sm:$0xf]
        %v654 = vld [vmem:[#allocation11 + $0x1c] sm:$0xf]
        %v655 = vld [vmem:[#allocation11 + $0x20] sm:$0xf]
        %v656 = vld [vmem:[#allocation11 + $0x24] sm:$0xf]
        %v657 = vld [vmem:[#allocation11 + $0x28] sm:$0xf]
        %v658 = vld [vmem:[#allocation11 + $0x2c] sm:$0xf]
        %v659 = vld [vmem:[#allocation11 + $0x30] sm:$0xf]
        %v660 = vld [vmem:[#allocation11 + $0x34] sm:$0xf]
        %v661 = vld [vmem:[#allocation11 + $0x38] sm:$0xf]
        %v662 = vld [vmem:[#allocation11 + $0x3c] sm:$0xf]
        %v663 = vld [vmem:[#allocation11 + $0x40] sm:$0xf]
        %v664 = vld [vmem:[#allocation11 + $0x44] sm:$0xf]
        %v665 = vld [vmem:[#allocation11 + $0x48] sm:$0xf]
        %v666 = vld [vmem:[#allocation11 + $0x4c] sm:$0xf]
        %v667 = vld [vmem:[#allocation11 + $0x50] sm:$0xf]
        %v668 = vld [vmem:[#allocation11 + $0x54] sm:$0xf]
        %v669 = vld [vmem:[#allocation11 + $0x58] sm:$0xf]
        %v670 = vld [vmem:[#allocation11 + $0x5c] sm:$0xf]
        %v671 = vld [vmem:[#allocation11 + $0x60] sm:$0xf]
        %v672 = vld [vmem:[#allocation11 + $0x64] sm:$0xf]
        %v673 = vld [vmem:[#allocation11 + $0x68] sm:$0xf]
        %v674 = vld [vmem:[#allocation11 + $0x6c] sm:$0xf]
        %v675 = vld [vmem:[#allocation11 + $0x70] sm:$0xf]
        %v676 = vld [vmem:[#allocation11 + $0x74] sm:$0xf]
        %v677 = vld [vmem:[#allocation11 + $0x78] sm:$0xf]
        %v678 = vld [vmem:[#allocation11 + $0x7c] sm:$0xf]
        %v679 = vld [vmem:[%s8] sm:$0x1]
        %v681 = vperm.slane %v679, 0
        %v715 = vunpack.c.l.b16 %v647
        %v716 = vunpack.c.l.b16 %v648
        %v717 = vunpack.c.l.b16 %v649
        %v718 = vunpack.c.l.b16 %v650
        %v719 = vunpack.c.l.b16 %v651
        %v720 = vunpack.c.l.b16 %v652
        %v721 = vunpack.c.l.b16 %v653
        %v722 = vunpack.c.l.b16 %v654
        %v723 = vunpack.c.l.b16 %v655
        %v724 = vunpack.c.l.b16 %v656
        %v725 = vunpack.c.l.b16 %v657
        %v726 = vunpack.c.l.b16 %v658
        %v727 = vunpack.c.l.b16 %v659
        %v728 = vunpack.c.l.b16 %v660
        %v729 = vunpack.c.l.b16 %v661
        %v730 = vunpack.c.l.b16 %v662
        %v731 = vunpack.c.l.b16 %v663
        %v732 = vunpack.c.l.b16 %v664
        %v733 = vunpack.c.l.b16 %v665
        %v734 = vunpack.c.l.b16 %v666
        %v735 = vunpack.c.l.b16 %v667
        %v736 = vunpack.c.l.b16 %v668
        %v737 = vunpack.c.l.b16 %v669
        %v738 = vunpack.c.l.b16 %v670
        %v739 = vunpack.c.l.b16 %v671
        %v740 = vunpack.c.l.b16 %v672
        %v741 = vunpack.c.l.b16 %v673
        %v742 = vunpack.c.l.b16 %v674
        %v743 = vunpack.c.l.b16 %v675
        %v744 = vunpack.c.l.b16 %v676
        %v745 = vunpack.c.l.b16 %v677
        %v746 = vunpack.c.l.b16 %v678
        %v747 = vpack.c.b16 %v716, %v715
        %v748 = vpack.c.b16 %v718, %v717
        %v749 = vpack.c.b16 %v720, %v719
        %v750 = vpack.c.b16 %v722, %v721
        %v751 = vpack.c.b16 %v724, %v723
        %v752 = vpack.c.b16 %v726, %v725
        %v753 = vpack.c.b16 %v728, %v727
        %v754 = vpack.c.b16 %v730, %v729
        %v755 = vpack.c.b16 %v732, %v731
        %v756 = vpack.c.b16 %v734, %v733
        %v757 = vpack.c.b16 %v736, %v735
        %v758 = vpack.c.b16 %v738, %v737
        %v759 = vpack.c.b16 %v740, %v739
        %v760 = vpack.c.b16 %v742, %v741
        %v761 = vpack.c.b16 %v744, %v743
        %v762 = vpack.c.b16 %v746, %v745
        %779 = vmatpush.bf16.msra.mxu0 %v754
        %780 = vmatpush.bf16.msra.mxu0 %v753
        %781 = vmatpush.bf16.msra.mxu0 %v752
        %782 = vmatpush.bf16.msra.mxu0 %v751
        %783 = vmatpush.bf16.msra.mxu0 %v750
        %784 = vmatpush.bf16.msra.mxu0 %v749
        %785 = vmatpush.bf16.msra.mxu0 %v748
        %786 = vmatpush.bf16.msra.mxu0 %v747
        %787 = vmatmul.bf16.gmra.mxu0 %v645
        %v788 = vpop.f32.mrf.mxu0
        %v789 = vadd.f32 %v681, %v788
        %v790 = vpop.f32.mrf.mxu0
        %791 = vdwg.mxu0
        %792 = vmatpush.bf16.msra.mxu0 %v762
        %793 = vmatpush.bf16.msra.mxu0 %v761
        %794 = vmatpush.bf16.msra.mxu0 %v760
        %795 = vmatpush.bf16.msra.mxu0 %v759
        %796 = vmatpush.bf16.msra.mxu0 %v758
        %797 = vmatpush.bf16.msra.mxu0 %v757
        %798 = vmatpush.bf16.msra.mxu0 %v756
        %799 = vmatpush.bf16.msra.mxu0 %v755
        %800 = vmatmul.bf16.gmra.mxu0 %v646
        %v801 = vpop.f32.mrf.mxu0
        %v802 = vadd.f32 %v789, %v801
        %v803 = vpop.f32.mrf.mxu0
        %804 = vdwg.mxu0
        %805 = vst [vmem:[%s426] sm:$0xff] %v802
        %s806 = sand.u32 %s231, 1
        %s807 = scalar_lea.sflag [#allocation4], %s806
        %s808 = sand.u32 %s231, 1
        %s809 = smul.addr %s808, 8
        %s810 = scalar_lea.vmem [#allocation13], %s809
        // Predicated region
        $region81: #{tpu_custom_call.1} parent=55 // pred_check
          %p811 = pneg %p241
        $region82: #{tpu_custom_call.1} parent=55 // pred_check_branch
          %813 = sbr.rel (%p811) target = $region84
        $region83: #{tpu_custom_call.1} parent=55 // pred_region
          %815 = vsyncadd %s807, 0
          %s816 = smul.addr %s29, 8
          %s817 = scalar_lea.hbm %s9, %s816
          %s819 = sshll.u32 %s810, 4
          %s820 = int_to_ptr.vmem [resolvable:$true] %s819
          %s821 = sshll.u32 %s817, 4
          %s822 = int_to_ptr.hbm [resolvable:$true] %s821
          %824 = dma.vmem_to_hbm [thread:$0]  %s820, 128, %s822, %s807
        $region84: #{tpu_custom_call.1} parent=55 // pred_fallthru
          _
      $region56: #{tpu_custom_call.1} parent=5 // pred_fallthru
        _
      %p825 = scmp.le.s32.totalorder 2, %s24
      // Predicated region
      $region85: #{tpu_custom_call.1} parent=5 // pred_check
        %p826 = pneg %p825
      $region86: #{tpu_custom_call.1} parent=5 // pred_check_branch
        %828 = sbr.rel (%p826) target = $region88
      $region87: #{tpu_custom_call.1} parent=5 // pred_region
        %s829 = ssub.s32 %s24, 2
        // Predicated region
        $region89: #{tpu_custom_call.1} parent=87 // pred_check
          %p830 = pneg %p247
        $region90: #{tpu_custom_call.1} parent=87 // pred_check_branch
          %832 = sbr.rel (%p830) target = $region92
        $region91: #{tpu_custom_call.1} parent=87 // pred_region
          %s833 = sand.u32 %s232, 1
          %s834 = scalar_lea.sflag [#allocation4], %s833
          %s835 = sand.u32 %s232, 1
          %s836 = smul.addr %s835, 8
          %s837 = scalar_lea.vmem [#allocation13], %s836
          %839 = dma.done %s834, 128
        $region92: #{tpu_custom_call.1} parent=87 // pred_fallthru
          _
      $region88: #{tpu_custom_call.1} parent=5 // pred_fallthru
        _
    $region6: #{tpu_custom_call.1} parent=1 // loop_footer
      %s28 = sadd.s32 1, %s24
    $region7: #{tpu_custom_call.1} parent=1 // loop_footer_branch
      %23 = sbr.rel target = $region3
    $region8: #{tpu_custom_call.1} parent=1 // loop_exit
      _
    %840 = vsyncpa [#allocation3], 1
    %s841 = scalar_lea.sflag [#allocation3], 1
    %842 = vsyncpa %s841, 1
    %843 = vsyncpa [#allocation6], 1
    %844 = vsyncpa [#allocation9], 1
    %845 = vsyncpa [#allocation12], 1
    %846 = vsyncpa [#allocation4], 1
    %s847 = scalar_lea.sflag [#allocation4], 1
    %848 = vsyncpa %s847, 1

</llo_original>
